<compile_context>
chip_gen: v6e
topology: v6e:2x2x1
jax: 0.10.0
libtpu: 0.0.40
codegen_flags: <defaults>
</compile_context>

<pallas_src>
import functools

import jax
import jax.numpy as jnp
from jax import lax
from jax.experimental import pallas as pl
from jax.experimental.pallas import tpu as pltpu

FEATS = 8          # input features (fixed by the module)
SUBLANES = 8       # batch rows folded onto sublanes
CHUNK_LANES = 256  # lanes per in-kernel chunk -> (8, 256) = 2 f32 vregs per value
CHUNK = SUBLANES * CHUNK_LANES  # 2048 batch elements per register-resident chunk


def _round_up(n, m):
    return ((n + m - 1) // m) * m


def _sigmoid(z):
    # tanh goes to the EUP slot (free relative to the binding VALU slot); the
    # surrounding mul/add are cheap VALU ops.  Mathematically == 1/(1+exp(-z)).
    return 0.5 * jnp.tanh(0.5 * z) + 0.5


def _mlp_kernel(x_ref, w1_ref, b1_ref, w2_ref, b2_ref, w3_ref, b3_ref, o_ref):
    """One batch tile.

    x_ref : (8, 8, L) VMEM  -- (feature, sublane, lane); batch folded over (sublane, lane)
    o_ref : (8, L)   VMEM   -- sublane+lane dense output
    w*/b* : flat f32 SMEM scalar tables (PyTorch (out, in) row-major)
    """
    L = x_ref.shape[2]
    n_chunks = L // CHUNK_LANES  # static

    @pl.loop(0, n_chunks)
    def _(c):
        j0 = pl.multiple_of(c * CHUNK_LANES, CHUNK_LANES)
        sl = pl.ds(j0, CHUNK_LANES)

        # 8 input-feature slabs, each a fully-populated (8, 256) value.
        xr = [x_ref[k, :, sl] for k in range(FEATS)]

        # Layer 1: 8 -> 6, unrolled scalar(SMEM) x vector(VPU) MACs.
        h1 = []
        for j in range(6):
            acc = xr[0] * w1_ref[j * 8]
            for k in range(1, 8):
                acc = acc + xr[k] * w1_ref[j * 8 + k]
            h1.append(_sigmoid(acc + b1_ref[j]))

        # Layer 2: 6 -> 4.
        h2 = []
        for j in range(4):
            acc = h1[0] * w2_ref[j * 6]
            for k in range(1, 6):
                acc = acc + h1[k] * w2_ref[j * 6 + k]
            h2.append(_sigmoid(acc + b2_ref[j]))

        # Layer 3: 4 -> 1; dense (8, 256) store.
        acc = h2[0] * w3_ref[0]
        for k in range(1, 4):
            acc = acc + h2[k] * w3_ref[k]
        o_ref[:, sl] = _sigmoid(acc + b3_ref[0]).astype(o_ref.dtype)


@functools.partial(jax.jit, static_argnames=("tile_b",))
def wide_deep_forward(x, params, *, tile_b=65536):
    """x: (B, 8) float32. params: PyTorch-layout weights/biases. Returns (B, 1)."""
    B = x.shape[0]

    # Pad the batch only to a multiple of one register chunk (<= 2047 rows);
    # the pad fuses with the transpose/reshape below under jit.  The big tile
    # does NOT need to divide the padded batch: the tail grid step is partial.
    b_pad = _round_up(B, CHUNK)
    tile = max(CHUNK, min(_round_up(tile_b, CHUNK), b_pad))
    lanes = b_pad // SUBLANES        # total lane extent of the folded layout
    tile_lanes = tile // SUBLANES    # block lane extent (multiple of 256)
    num_tiles = pl.cdiv(lanes, tile_lanes)

    # Feature-major, batch folded over (sublane, lane): (8, 8, b_pad/8).
    xt = x.T.astype(jnp.float32)                     # (8, B)
    if b_pad != B:
        xt = jnp.pad(xt, ((0, 0), (0, b_pad - B)))
    x3 = xt.reshape(FEATS, SUBLANES, lanes)          # free row-major reshape

    # Flatten weights/biases (PyTorch (out, in) row-major) into SMEM scalar tables.
    w1f = params["w1"].reshape(-1).astype(jnp.float32)  # (48,)
    w2f = params["w2"].reshape(-1).astype(jnp.float32)  # (24,)
    w3f = params["w3"].reshape(-1).astype(jnp.float32)  # (4,)
    b1 = params["b1"].reshape(-1).astype(jnp.float32)   # (6,)
    b2 = params["b2"].reshape(-1).astype(jnp.float32)   # (4,)
    b3 = params["b3"].reshape(-1).astype(jnp.float32)   # (1,)

    smem = pl.BlockSpec(memory_space=pltpu.MemorySpace.SMEM)

    out = pl.pallas_call(
        _mlp_kernel,
        out_shape=jax.ShapeDtypeStruct((SUBLANES, lanes), jnp.float32),
        grid=(num_tiles,),
        in_specs=[
            pl.BlockSpec((FEATS, SUBLANES, tile_lanes), lambda i: (0, 0, i)),
            smem, smem, smem, smem, smem, smem,          # weights/biases in SMEM
        ],
        out_specs=pl.BlockSpec((SUBLANES, tile_lanes), lambda i: (0, i)),
        compiler_params=pltpu.CompilerParams(
            dimension_semantics=("parallel",),  # batch axis: independent per step
        ),
    )(x3, w1f, b1, w2f, b2, w3f, b3)

    # Layout-preserving flatten (no transpose copy); drop padded rows.
    return out.reshape(-1)[:B, None]


def init_params(key):
    """Deterministic init mimicking PyTorch nn.Linear default (uniform +/- 1/sqrt(fan_in))."""
    dims = [(6, 8), (4, 6), (1, 4)]  # (out, in) for l1, l2, l3
    params = {}
    for idx, (out_f, in_f) in enumerate(dims, start=1):
        key, kw, kb = jax.random.split(key, 3)
        bound = 1.0 / (in_f ** 0.5)
        params[f"w{idx}"] = jax.random.uniform(
            kw, (out_f, in_f), jnp.float32, minval=-bound, maxval=bound
        )
        params[f"b{idx}"] = jax.random.uniform(
            kb, (out_f,), jnp.float32, minval=-bound, maxval=bound
        )
    return params


def reference_forward(x, params):
    """Plain-JAX reference matching the PyTorch module exactly."""
    h1 = jax.nn.sigmoid(x @ params["w1"].T + params["b1"])
    h2 = jax.nn.sigmoid(h1 @ params["w2"].T + params["b2"])
    return jax.nn.sigmoid(h2 @ params["w3"].T + params["b3"])


if __name__ == "__main__":
    key = jax.random.PRNGKey(0)
    key, kx, kx2 = jax.random.split(key, 3)
    params = init_params(key)

    # Small shape consistent with the module (batch=2, in_features=8).
    x = jax.random.normal(kx, (2, 8), jnp.float32)
    y = wide_deep_forward(x, params)
    jax.block_until_ready(y)
    y_ref = reference_forward(x, params)
    assert y.shape == (2, 1), y.shape
    assert jnp.allclose(y, y_ref, atol=5e-5, rtol=5e-5), (y, y_ref)

    # Larger batch: default 65536-element tile, 2 grid steps, partial tail block
    # (B=70000 -> padded to 71680 rows -> lane extent 8960 vs block 8192).
    x2 = jax.random.normal(kx2, (70000, 8), jnp.float32)
    y2 = wide_deep_forward(x2, params)
    jax.block_until_ready(y2)
    assert y2.shape == (70000, 1), y2.shape
    assert jnp.allclose(y2, reference_forward(x2, params), atol=5e-5, rtol=5e-5)

    print("KERNEL_OK")
</pallas_src>

<mosaic_0001>
module attributes {stable_mosaic.version = 11 : i64} {
  func.func @_mlp_kernel(%arg0: i32, %arg1: memref<8x8x256xf32, #tpu.memory_space<vmem>>, %arg2: memref<48xf32, #tpu.memory_space<smem>>, %arg3: memref<6xf32, #tpu.memory_space<smem>>, %arg4: memref<24xf32, #tpu.memory_space<smem>>, %arg5: memref<4xf32, #tpu.memory_space<smem>>, %arg6: memref<4xf32, #tpu.memory_space<smem>>, %arg7: memref<1xf32, #tpu.memory_space<smem>>, %arg8: memref<8x256xf32, #tpu.memory_space<vmem>>) attributes {dimension_semantics = [#tpu.dimension_semantics<parallel>], iteration_bounds = array<i64: 1>, scalar_prefetch = 0 : i64, scratch_operands = 0 : i64, tpu.core_type = #tpu.core_type<tc>, window_params = [{transform_indices = @transform_0, window_bounds = array<i64: 8, 8, 256>}, {transform_indices = @transform_1, window_bounds = array<i64: 48>}, {transform_indices = @transform_2, window_bounds = array<i64: 6>}, {transform_indices = @transform_3, window_bounds = array<i64: 24>}, {transform_indices = @transform_4, window_bounds = array<i64: 4>}, {transform_indices = @transform_5, window_bounds = array<i64: 4>}, {transform_indices = @transform_6, window_bounds = array<i64: 1>}, {transform_indices = @transform_7, window_bounds = array<i64: 8, 256>}]} {
    %c0_i32 = arith.constant 0 : i32
    %c1_i32 = arith.constant 1 : i32
    %0 = arith.muli %c0_i32, %c1_i32 : i32
    %c0_i32_0 = arith.constant 0 : i32
    %1 = arith.addi %c0_i32_0, %0 : i32
    %c256_i32 = arith.constant 256 : i32
    %2 = arith.muli %1, %c256_i32 : i32
    %3 = tpu.assume_multiple %2, 256 : i32
    %c0 = arith.constant 0 : index
    %c0_1 = arith.constant 0 : index
    %4 = arith.index_cast %3 : i32 to index
    %5 = vector.load %arg1[%c0, %c0_1, %4] : memref<8x8x256xf32, #tpu.memory_space<vmem>>, vector<1x8x256xf32>
    %6 = vector.shape_cast %5 : vector<1x8x256xf32> to vector<8x256xf32>
    %c1 = arith.constant 1 : index
    %c0_2 = arith.constant 0 : index
    %7 = arith.index_cast %3 : i32 to index
    %8 = vector.load %arg1[%c1, %c0_2, %7] : memref<8x8x256xf32, #tpu.memory_space<vmem>>, vector<1x8x256xf32>
    %9 = vector.shape_cast %8 : vector<1x8x256xf32> to vector<8x256xf32>
    %c2 = arith.constant 2 : index
    %c0_3 = arith.constant 0 : index
    %10 = arith.index_cast %3 : i32 to index
    %11 = vector.load %arg1[%c2, %c0_3, %10] : memref<8x8x256xf32, #tpu.memory_space<vmem>>, vector<1x8x256xf32>
    %12 = vector.shape_cast %11 : vector<1x8x256xf32> to vector<8x256xf32>
    %c3 = arith.constant 3 : index
    %c0_4 = arith.constant 0 : index
    %13 = arith.index_cast %3 : i32 to index
    %14 = vector.load %arg1[%c3, %c0_4, %13] : memref<8x8x256xf32, #tpu.memory_space<vmem>>, vector<1x8x256xf32>
    %15 = vector.shape_cast %14 : vector<1x8x256xf32> to vector<8x256xf32>
    %c4 = arith.constant 4 : index
    %c0_5 = arith.constant 0 : index
    %16 = arith.index_cast %3 : i32 to index
    %17 = vector.load %arg1[%c4, %c0_5, %16] : memref<8x8x256xf32, #tpu.memory_space<vmem>>, vector<1x8x256xf32>
    %18 = vector.shape_cast %17 : vector<1x8x256xf32> to vector<8x256xf32>
    %c5 = arith.constant 5 : index
    %c0_6 = arith.constant 0 : index
    %19 = arith.index_cast %3 : i32 to index
    %20 = vector.load %arg1[%c5, %c0_6, %19] : memref<8x8x256xf32, #tpu.memory_space<vmem>>, vector<1x8x256xf32>
    %21 = vector.shape_cast %20 : vector<1x8x256xf32> to vector<8x256xf32>
    %c6 = arith.constant 6 : index
    %c0_7 = arith.constant 0 : index
    %22 = arith.index_cast %3 : i32 to index
    %23 = vector.load %arg1[%c6, %c0_7, %22] : memref<8x8x256xf32, #tpu.memory_space<vmem>>, vector<1x8x256xf32>
    %24 = vector.shape_cast %23 : vector<1x8x256xf32> to vector<8x256xf32>
    %c7 = arith.constant 7 : index
    %c0_8 = arith.constant 0 : index
    %25 = arith.index_cast %3 : i32 to index
    %26 = vector.load %arg1[%c7, %c0_8, %25] : memref<8x8x256xf32, #tpu.memory_space<vmem>>, vector<1x8x256xf32>
    %27 = vector.shape_cast %26 : vector<1x8x256xf32> to vector<8x256xf32>
    %c0_9 = arith.constant 0 : index
    %28 = memref.load %arg2[%c0_9] : memref<48xf32, #tpu.memory_space<smem>>
    %29 = vector.broadcast %28 : f32 to vector<8x256xf32>
    %30 = arith.mulf %6, %29 : vector<8x256xf32>
    %c1_10 = arith.constant 1 : index
    %31 = memref.load %arg2[%c1_10] : memref<48xf32, #tpu.memory_space<smem>>
    %32 = vector.broadcast %31 : f32 to vector<8x256xf32>
    %33 = arith.mulf %9, %32 : vector<8x256xf32>
    %34 = arith.addf %30, %33 : vector<8x256xf32>
    %c2_11 = arith.constant 2 : index
    %35 = memref.load %arg2[%c2_11] : memref<48xf32, #tpu.memory_space<smem>>
    %36 = vector.broadcast %35 : f32 to vector<8x256xf32>
    %37 = arith.mulf %12, %36 : vector<8x256xf32>
    %38 = arith.addf %34, %37 : vector<8x256xf32>
    %c3_12 = arith.constant 3 : index
    %39 = memref.load %arg2[%c3_12] : memref<48xf32, #tpu.memory_space<smem>>
    %40 = vector.broadcast %39 : f32 to vector<8x256xf32>
    %41 = arith.mulf %15, %40 : vector<8x256xf32>
    %42 = arith.addf %38, %41 : vector<8x256xf32>
    %c4_13 = arith.constant 4 : index
    %43 = memref.load %arg2[%c4_13] : memref<48xf32, #tpu.memory_space<smem>>
    %44 = vector.broadcast %43 : f32 to vector<8x256xf32>
    %45 = arith.mulf %18, %44 : vector<8x256xf32>
    %46 = arith.addf %42, %45 : vector<8x256xf32>
    %c5_14 = arith.constant 5 : index
    %47 = memref.load %arg2[%c5_14] : memref<48xf32, #tpu.memory_space<smem>>
    %48 = vector.broadcast %47 : f32 to vector<8x256xf32>
    %49 = arith.mulf %21, %48 : vector<8x256xf32>
    %50 = arith.addf %46, %49 : vector<8x256xf32>
    %c6_15 = arith.constant 6 : index
    %51 = memref.load %arg2[%c6_15] : memref<48xf32, #tpu.memory_space<smem>>
    %52 = vector.broadcast %51 : f32 to vector<8x256xf32>
    %53 = arith.mulf %24, %52 : vector<8x256xf32>
    %54 = arith.addf %50, %53 : vector<8x256xf32>
    %c7_16 = arith.constant 7 : index
    %55 = memref.load %arg2[%c7_16] : memref<48xf32, #tpu.memory_space<smem>>
    %56 = vector.broadcast %55 : f32 to vector<8x256xf32>
    %57 = arith.mulf %27, %56 : vector<8x256xf32>
    %58 = arith.addf %54, %57 : vector<8x256xf32>
    %c0_17 = arith.constant 0 : index
    %59 = memref.load %arg3[%c0_17] : memref<6xf32, #tpu.memory_space<smem>>
    %60 = vector.broadcast %59 : f32 to vector<8x256xf32>
    %61 = arith.addf %58, %60 : vector<8x256xf32>
    %cst = arith.constant 5.000000e-01 : f32
    %62 = vector.broadcast %cst : f32 to vector<8x256xf32>
    %63 = arith.mulf %62, %61 : vector<8x256xf32>
    %64 = math.tanh %63 : vector<8x256xf32>
    %cst_18 = arith.constant 5.000000e-01 : f32
    %65 = vector.broadcast %cst_18 : f32 to vector<8x256xf32>
    %66 = arith.mulf %65, %64 : vector<8x256xf32>
    %cst_19 = arith.constant 5.000000e-01 : f32
    %67 = vector.broadcast %cst_19 : f32 to vector<8x256xf32>
    %68 = arith.addf %66, %67 : vector<8x256xf32>
    %c8 = arith.constant 8 : index
    %69 = memref.load %arg2[%c8] : memref<48xf32, #tpu.memory_space<smem>>
    %70 = vector.broadcast %69 : f32 to vector<8x256xf32>
    %71 = arith.mulf %6, %70 : vector<8x256xf32>
    %c9 = arith.constant 9 : index
    %72 = memref.load %arg2[%c9] : memref<48xf32, #tpu.memory_space<smem>>
    %73 = vector.broadcast %72 : f32 to vector<8x256xf32>
    %74 = arith.mulf %9, %73 : vector<8x256xf32>
    %75 = arith.addf %71, %74 : vector<8x256xf32>
    %c10 = arith.constant 10 : index
    %76 = memref.load %arg2[%c10] : memref<48xf32, #tpu.memory_space<smem>>
    %77 = vector.broadcast %76 : f32 to vector<8x256xf32>
    %78 = arith.mulf %12, %77 : vector<8x256xf32>
    %79 = arith.addf %75, %78 : vector<8x256xf32>
    %c11 = arith.constant 11 : index
    %80 = memref.load %arg2[%c11] : memref<48xf32, #tpu.memory_space<smem>>
    %81 = vector.broadcast %80 : f32 to vector<8x256xf32>
    %82 = arith.mulf %15, %81 : vector<8x256xf32>
    %83 = arith.addf %79, %82 : vector<8x256xf32>
    %c12 = arith.constant 12 : index
    %84 = memref.load %arg2[%c12] : memref<48xf32, #tpu.memory_space<smem>>
    %85 = vector.broadcast %84 : f32 to vector<8x256xf32>
    %86 = arith.mulf %18, %85 : vector<8x256xf32>
    %87 = arith.addf %83, %86 : vector<8x256xf32>
    %c13 = arith.constant 13 : index
    %88 = memref.load %arg2[%c13] : memref<48xf32, #tpu.memory_space<smem>>
    %89 = vector.broadcast %88 : f32 to vector<8x256xf32>
    %90 = arith.mulf %21, %89 : vector<8x256xf32>
    %91 = arith.addf %87, %90 : vector<8x256xf32>
    %c14 = arith.constant 14 : index
    %92 = memref.load %arg2[%c14] : memref<48xf32, #tpu.memory_space<smem>>
    %93 = vector.broadcast %92 : f32 to vector<8x256xf32>
    %94 = arith.mulf %24, %93 : vector<8x256xf32>
    %95 = arith.addf %91, %94 : vector<8x256xf32>
    %c15 = arith.constant 15 : index
    %96 = memref.load %arg2[%c15] : memref<48xf32, #tpu.memory_space<smem>>
    %97 = vector.broadcast %96 : f32 to vector<8x256xf32>
    %98 = arith.mulf %27, %97 : vector<8x256xf32>
    %99 = arith.addf %95, %98 : vector<8x256xf32>
    %c1_20 = arith.constant 1 : index
    %100 = memref.load %arg3[%c1_20] : memref<6xf32, #tpu.memory_space<smem>>
    %101 = vector.broadcast %100 : f32 to vector<8x256xf32>
    %102 = arith.addf %99, %101 : vector<8x256xf32>
    %cst_21 = arith.constant 5.000000e-01 : f32
    %103 = vector.broadcast %cst_21 : f32 to vector<8x256xf32>
    %104 = arith.mulf %103, %102 : vector<8x256xf32>
    %105 = math.tanh %104 : vector<8x256xf32>
    %cst_22 = arith.constant 5.000000e-01 : f32
    %106 = vector.broadcast %cst_22 : f32 to vector<8x256xf32>
    %107 = arith.mulf %106, %105 : vector<8x256xf32>
    %cst_23 = arith.constant 5.000000e-01 : f32
    %108 = vector.broadcast %cst_23 : f32 to vector<8x256xf32>
    %109 = arith.addf %107, %108 : vector<8x256xf32>
    %c16 = arith.constant 16 : index
    %110 = memref.load %arg2[%c16] : memref<48xf32, #tpu.memory_space<smem>>
    %111 = vector.broadcast %110 : f32 to vector<8x256xf32>
    %112 = arith.mulf %6, %111 : vector<8x256xf32>
    %c17 = arith.constant 17 : index
    %113 = memref.load %arg2[%c17] : memref<48xf32, #tpu.memory_space<smem>>
    %114 = vector.broadcast %113 : f32 to vector<8x256xf32>
    %115 = arith.mulf %9, %114 : vector<8x256xf32>
    %116 = arith.addf %112, %115 : vector<8x256xf32>
    %c18 = arith.constant 18 : index
    %117 = memref.load %arg2[%c18] : memref<48xf32, #tpu.memory_space<smem>>
    %118 = vector.broadcast %117 : f32 to vector<8x256xf32>
    %119 = arith.mulf %12, %118 : vector<8x256xf32>
    %120 = arith.addf %116, %119 : vector<8x256xf32>
    %c19 = arith.constant 19 : index
    %121 = memref.load %arg2[%c19] : memref<48xf32, #tpu.memory_space<smem>>
    %122 = vector.broadcast %121 : f32 to vector<8x256xf32>
    %123 = arith.mulf %15, %122 : vector<8x256xf32>
    %124 = arith.addf %120, %123 : vector<8x256xf32>
    %c20 = arith.constant 20 : index
    %125 = memref.load %arg2[%c20] : memref<48xf32, #tpu.memory_space<smem>>
    %126 = vector.broadcast %125 : f32 to vector<8x256xf32>
    %127 = arith.mulf %18, %126 : vector<8x256xf32>
    %128 = arith.addf %124, %127 : vector<8x256xf32>
    %c21 = arith.constant 21 : index
    %129 = memref.load %arg2[%c21] : memref<48xf32, #tpu.memory_space<smem>>
    %130 = vector.broadcast %129 : f32 to vector<8x256xf32>
    %131 = arith.mulf %21, %130 : vector<8x256xf32>
    %132 = arith.addf %128, %131 : vector<8x256xf32>
    %c22 = arith.constant 22 : index
    %133 = memref.load %arg2[%c22] : memref<48xf32, #tpu.memory_space<smem>>
    %134 = vector.broadcast %133 : f32 to vector<8x256xf32>
    %135 = arith.mulf %24, %134 : vector<8x256xf32>
    %136 = arith.addf %132, %135 : vector<8x256xf32>
    %c23 = arith.constant 23 : index
    %137 = memref.load %arg2[%c23] : memref<48xf32, #tpu.memory_space<smem>>
    %138 = vector.broadcast %137 : f32 to vector<8x256xf32>
    %139 = arith.mulf %27, %138 : vector<8x256xf32>
    %140 = arith.addf %136, %139 : vector<8x256xf32>
    %c2_24 = arith.constant 2 : index
    %141 = memref.load %arg3[%c2_24] : memref<6xf32, #tpu.memory_space<smem>>
    %142 = vector.broadcast %141 : f32 to vector<8x256xf32>
    %143 = arith.addf %140, %142 : vector<8x256xf32>
    %cst_25 = arith.constant 5.000000e-01 : f32
    %144 = vector.broadcast %cst_25 : f32 to vector<8x256xf32>
    %145 = arith.mulf %144, %143 : vector<8x256xf32>
    %146 = math.tanh %145 : vector<8x256xf32>
    %cst_26 = arith.constant 5.000000e-01 : f32
    %147 = vector.broadcast %cst_26 : f32 to vector<8x256xf32>
    %148 = arith.mulf %147, %146 : vector<8x256xf32>
    %cst_27 = arith.constant 5.000000e-01 : f32
    %149 = vector.broadcast %cst_27 : f32 to vector<8x256xf32>
    %150 = arith.addf %148, %149 : vector<8x256xf32>
    %c24 = arith.constant 24 : index
    %151 = memref.load %arg2[%c24] : memref<48xf32, #tpu.memory_space<smem>>
    %152 = vector.broadcast %151 : f32 to vector<8x256xf32>
    %153 = arith.mulf %6, %152 : vector<8x256xf32>
    %c25 = arith.constant 25 : index
    %154 = memref.load %arg2[%c25] : memref<48xf32, #tpu.memory_space<smem>>
    %155 = vector.broadcast %154 : f32 to vector<8x256xf32>
    %156 = arith.mulf %9, %155 : vector<8x256xf32>
    %157 = arith.addf %153, %156 : vector<8x256xf32>
    %c26 = arith.constant 26 : index
    %158 = memref.load %arg2[%c26] : memref<48xf32, #tpu.memory_space<smem>>
    %159 = vector.broadcast %158 : f32 to vector<8x256xf32>
    %160 = arith.mulf %12, %159 : vector<8x256xf32>
    %161 = arith.addf %157, %160 : vector<8x256xf32>
    %c27 = arith.constant 27 : index
    %162 = memref.load %arg2[%c27] : memref<48xf32, #tpu.memory_space<smem>>
    %163 = vector.broadcast %162 : f32 to vector<8x256xf32>
    %164 = arith.mulf %15, %163 : vector<8x256xf32>
    %165 = arith.addf %161, %164 : vector<8x256xf32>
    %c28 = arith.constant 28 : index
    %166 = memref.load %arg2[%c28] : memref<48xf32, #tpu.memory_space<smem>>
    %167 = vector.broadcast %166 : f32 to vector<8x256xf32>
    %168 = arith.mulf %18, %167 : vector<8x256xf32>
    %169 = arith.addf %165, %168 : vector<8x256xf32>
    %c29 = arith.constant 29 : index
    %170 = memref.load %arg2[%c29] : memref<48xf32, #tpu.memory_space<smem>>
    %171 = vector.broadcast %170 : f32 to vector<8x256xf32>
    %172 = arith.mulf %21, %171 : vector<8x256xf32>
    %173 = arith.addf %169, %172 : vector<8x256xf32>
    %c30 = arith.constant 30 : index
    %174 = memref.load %arg2[%c30] : memref<48xf32, #tpu.memory_space<smem>>
    %175 = vector.broadcast %174 : f32 to vector<8x256xf32>
    %176 = arith.mulf %24, %175 : vector<8x256xf32>
    %177 = arith.addf %173, %176 : vector<8x256xf32>
    %c31 = arith.constant 31 : index
    %178 = memref.load %arg2[%c31] : memref<48xf32, #tpu.memory_space<smem>>
    %179 = vector.broadcast %178 : f32 to vector<8x256xf32>
    %180 = arith.mulf %27, %179 : vector<8x256xf32>
    %181 = arith.addf %177, %180 : vector<8x256xf32>
    %c3_28 = arith.constant 3 : index
    %182 = memref.load %arg3[%c3_28] : memref<6xf32, #tpu.memory_space<smem>>
    %183 = vector.broadcast %182 : f32 to vector<8x256xf32>
    %184 = arith.addf %181, %183 : vector<8x256xf32>
    %cst_29 = arith.constant 5.000000e-01 : f32
    %185 = vector.broadcast %cst_29 : f32 to vector<8x256xf32>
    %186 = arith.mulf %185, %184 : vector<8x256xf32>
    %187 = math.tanh %186 : vector<8x256xf32>
    %cst_30 = arith.constant 5.000000e-01 : f32
    %188 = vector.broadcast %cst_30 : f32 to vector<8x256xf32>
    %189 = arith.mulf %188, %187 : vector<8x256xf32>
    %cst_31 = arith.constant 5.000000e-01 : f32
    %190 = vector.broadcast %cst_31 : f32 to vector<8x256xf32>
    %191 = arith.addf %189, %190 : vector<8x256xf32>
    %c32 = arith.constant 32 : index
    %192 = memref.load %arg2[%c32] : memref<48xf32, #tpu.memory_space<smem>>
    %193 = vector.broadcast %192 : f32 to vector<8x256xf32>
    %194 = arith.mulf %6, %193 : vector<8x256xf32>
    %c33 = arith.constant 33 : index
    %195 = memref.load %arg2[%c33] : memref<48xf32, #tpu.memory_space<smem>>
    %196 = vector.broadcast %195 : f32 to vector<8x256xf32>
    %197 = arith.mulf %9, %196 : vector<8x256xf32>
    %198 = arith.addf %194, %197 : vector<8x256xf32>
    %c34 = arith.constant 34 : index
    %199 = memref.load %arg2[%c34] : memref<48xf32, #tpu.memory_space<smem>>
    %200 = vector.broadcast %199 : f32 to vector<8x256xf32>
    %201 = arith.mulf %12, %200 : vector<8x256xf32>
    %202 = arith.addf %198, %201 : vector<8x256xf32>
    %c35 = arith.constant 35 : index
    %203 = memref.load %arg2[%c35] : memref<48xf32, #tpu.memory_space<smem>>
    %204 = vector.broadcast %203 : f32 to vector<8x256xf32>
    %205 = arith.mulf %15, %204 : vector<8x256xf32>
    %206 = arith.addf %202, %205 : vector<8x256xf32>
    %c36 = arith.constant 36 : index
    %207 = memref.load %arg2[%c36] : memref<48xf32, #tpu.memory_space<smem>>
    %208 = vector.broadcast %207 : f32 to vector<8x256xf32>
    %209 = arith.mulf %18, %208 : vector<8x256xf32>
    %210 = arith.addf %206, %209 : vector<8x256xf32>
    %c37 = arith.constant 37 : index
    %211 = memref.load %arg2[%c37] : memref<48xf32, #tpu.memory_space<smem>>
    %212 = vector.broadcast %211 : f32 to vector<8x256xf32>
    %213 = arith.mulf %21, %212 : vector<8x256xf32>
    %214 = arith.addf %210, %213 : vector<8x256xf32>
    %c38 = arith.constant 38 : index
    %215 = memref.load %arg2[%c38] : memref<48xf32, #tpu.memory_space<smem>>
    %216 = vector.broadcast %215 : f32 to vector<8x256xf32>
    %217 = arith.mulf %24, %216 : vector<8x256xf32>
    %218 = arith.addf %214, %217 : vector<8x256xf32>
    %c39 = arith.constant 39 : index
    %219 = memref.load %arg2[%c39] : memref<48xf32, #tpu.memory_space<smem>>
    %220 = vector.broadcast %219 : f32 to vector<8x256xf32>
    %221 = arith.mulf %27, %220 : vector<8x256xf32>
    %222 = arith.addf %218, %221 : vector<8x256xf32>
    %c4_32 = arith.constant 4 : index
    %223 = memref.load %arg3[%c4_32] : memref<6xf32, #tpu.memory_space<smem>>
    %224 = vector.broadcast %223 : f32 to vector<8x256xf32>
    %225 = arith.addf %222, %224 : vector<8x256xf32>
    %cst_33 = arith.constant 5.000000e-01 : f32
    %226 = vector.broadcast %cst_33 : f32 to vector<8x256xf32>
    %227 = arith.mulf %226, %225 : vector<8x256xf32>
    %228 = math.tanh %227 : vector<8x256xf32>
    %cst_34 = arith.constant 5.000000e-01 : f32
    %229 = vector.broadcast %cst_34 : f32 to vector<8x256xf32>
    %230 = arith.mulf %229, %228 : vector<8x256xf32>
    %cst_35 = arith.constant 5.000000e-01 : f32
    %231 = vector.broadcast %cst_35 : f32 to vector<8x256xf32>
    %232 = arith.addf %230, %231 : vector<8x256xf32>
    %c40 = arith.constant 40 : index
    %233 = memref.load %arg2[%c40] : memref<48xf32, #tpu.memory_space<smem>>
    %234 = vector.broadcast %233 : f32 to vector<8x256xf32>
    %235 = arith.mulf %6, %234 : vector<8x256xf32>
    %c41 = arith.constant 41 : index
    %236 = memref.load %arg2[%c41] : memref<48xf32, #tpu.memory_space<smem>>
    %237 = vector.broadcast %236 : f32 to vector<8x256xf32>
    %238 = arith.mulf %9, %237 : vector<8x256xf32>
    %239 = arith.addf %235, %238 : vector<8x256xf32>
    %c42 = arith.constant 42 : index
    %240 = memref.load %arg2[%c42] : memref<48xf32, #tpu.memory_space<smem>>
    %241 = vector.broadcast %240 : f32 to vector<8x256xf32>
    %242 = arith.mulf %12, %241 : vector<8x256xf32>
    %243 = arith.addf %239, %242 : vector<8x256xf32>
    %c43 = arith.constant 43 : index
    %244 = memref.load %arg2[%c43] : memref<48xf32, #tpu.memory_space<smem>>
    %245 = vector.broadcast %244 : f32 to vector<8x256xf32>
    %246 = arith.mulf %15, %245 : vector<8x256xf32>
    %247 = arith.addf %243, %246 : vector<8x256xf32>
    %c44 = arith.constant 44 : index
    %248 = memref.load %arg2[%c44] : memref<48xf32, #tpu.memory_space<smem>>
    %249 = vector.broadcast %248 : f32 to vector<8x256xf32>
    %250 = arith.mulf %18, %249 : vector<8x256xf32>
    %251 = arith.addf %247, %250 : vector<8x256xf32>
    %c45 = arith.constant 45 : index
    %252 = memref.load %arg2[%c45] : memref<48xf32, #tpu.memory_space<smem>>
    %253 = vector.broadcast %252 : f32 to vector<8x256xf32>
    %254 = arith.mulf %21, %253 : vector<8x256xf32>
    %255 = arith.addf %251, %254 : vector<8x256xf32>
    %c46 = arith.constant 46 : index
    %256 = memref.load %arg2[%c46] : memref<48xf32, #tpu.memory_space<smem>>
    %257 = vector.broadcast %256 : f32 to vector<8x256xf32>
    %258 = arith.mulf %24, %257 : vector<8x256xf32>
    %259 = arith.addf %255, %258 : vector<8x256xf32>
    %c47 = arith.constant 47 : index
    %260 = memref.load %arg2[%c47] : memref<48xf32, #tpu.memory_space<smem>>
    %261 = vector.broadcast %260 : f32 to vector<8x256xf32>
    %262 = arith.mulf %27, %261 : vector<8x256xf32>
    %263 = arith.addf %259, %262 : vector<8x256xf32>
    %c5_36 = arith.constant 5 : index
    %264 = memref.load %arg3[%c5_36] : memref<6xf32, #tpu.memory_space<smem>>
    %265 = vector.broadcast %264 : f32 to vector<8x256xf32>
    %266 = arith.addf %263, %265 : vector<8x256xf32>
    %cst_37 = arith.constant 5.000000e-01 : f32
    %267 = vector.broadcast %cst_37 : f32 to vector<8x256xf32>
    %268 = arith.mulf %267, %266 : vector<8x256xf32>
    %269 = math.tanh %268 : vector<8x256xf32>
    %cst_38 = arith.constant 5.000000e-01 : f32
    %270 = vector.broadcast %cst_38 : f32 to vector<8x256xf32>
    %271 = arith.mulf %270, %269 : vector<8x256xf32>
    %cst_39 = arith.constant 5.000000e-01 : f32
    %272 = vector.broadcast %cst_39 : f32 to vector<8x256xf32>
    %273 = arith.addf %271, %272 : vector<8x256xf32>
    %c0_40 = arith.constant 0 : index
    %274 = memref.load %arg4[%c0_40] : memref<24xf32, #tpu.memory_space<smem>>
    %275 = vector.broadcast %274 : f32 to vector<8x256xf32>
    %276 = arith.mulf %68, %275 : vector<8x256xf32>
    %c1_41 = arith.constant 1 : index
    %277 = memref.load %arg4[%c1_41] : memref<24xf32, #tpu.memory_space<smem>>
    %278 = vector.broadcast %277 : f32 to vector<8x256xf32>
    %279 = arith.mulf %109, %278 : vector<8x256xf32>
    %280 = arith.addf %276, %279 : vector<8x256xf32>
    %c2_42 = arith.constant 2 : index
    %281 = memref.load %arg4[%c2_42] : memref<24xf32, #tpu.memory_space<smem>>
    %282 = vector.broadcast %281 : f32 to vector<8x256xf32>
    %283 = arith.mulf %150, %282 : vector<8x256xf32>
    %284 = arith.addf %280, %283 : vector<8x256xf32>
    %c3_43 = arith.constant 3 : index
    %285 = memref.load %arg4[%c3_43] : memref<24xf32, #tpu.memory_space<smem>>
    %286 = vector.broadcast %285 : f32 to vector<8x256xf32>
    %287 = arith.mulf %191, %286 : vector<8x256xf32>
    %288 = arith.addf %284, %287 : vector<8x256xf32>
    %c4_44 = arith.constant 4 : index
    %289 = memref.load %arg4[%c4_44] : memref<24xf32, #tpu.memory_space<smem>>
    %290 = vector.broadcast %289 : f32 to vector<8x256xf32>
    %291 = arith.mulf %232, %290 : vector<8x256xf32>
    %292 = arith.addf %288, %291 : vector<8x256xf32>
    %c5_45 = arith.constant 5 : index
    %293 = memref.load %arg4[%c5_45] : memref<24xf32, #tpu.memory_space<smem>>
    %294 = vector.broadcast %293 : f32 to vector<8x256xf32>
    %295 = arith.mulf %273, %294 : vector<8x256xf32>
    %296 = arith.addf %292, %295 : vector<8x256xf32>
    %c0_46 = arith.constant 0 : index
    %297 = memref.load %arg5[%c0_46] : memref<4xf32, #tpu.memory_space<smem>>
    %298 = vector.broadcast %297 : f32 to vector<8x256xf32>
    %299 = arith.addf %296, %298 : vector<8x256xf32>
    %cst_47 = arith.constant 5.000000e-01 : f32
    %300 = vector.broadcast %cst_47 : f32 to vector<8x256xf32>
    %301 = arith.mulf %300, %299 : vector<8x256xf32>
    %302 = math.tanh %301 : vector<8x256xf32>
    %cst_48 = arith.constant 5.000000e-01 : f32
    %303 = vector.broadcast %cst_48 : f32 to vector<8x256xf32>
    %304 = arith.mulf %303, %302 : vector<8x256xf32>
    %cst_49 = arith.constant 5.000000e-01 : f32
    %305 = vector.broadcast %cst_49 : f32 to vector<8x256xf32>
    %306 = arith.addf %304, %305 : vector<8x256xf32>
    %c6_50 = arith.constant 6 : index
    %307 = memref.load %arg4[%c6_50] : memref<24xf32, #tpu.memory_space<smem>>
    %308 = vector.broadcast %307 : f32 to vector<8x256xf32>
    %309 = arith.mulf %68, %308 : vector<8x256xf32>
    %c7_51 = arith.constant 7 : index
    %310 = memref.load %arg4[%c7_51] : memref<24xf32, #tpu.memory_space<smem>>
    %311 = vector.broadcast %310 : f32 to vector<8x256xf32>
    %312 = arith.mulf %109, %311 : vector<8x256xf32>
    %313 = arith.addf %309, %312 : vector<8x256xf32>
    %c8_52 = arith.constant 8 : index
    %314 = memref.load %arg4[%c8_52] : memref<24xf32, #tpu.memory_space<smem>>
    %315 = vector.broadcast %314 : f32 to vector<8x256xf32>
    %316 = arith.mulf %150, %315 : vector<8x256xf32>
    %317 = arith.addf %313, %316 : vector<8x256xf32>
    %c9_53 = arith.constant 9 : index
    %318 = memref.load %arg4[%c9_53] : memref<24xf32, #tpu.memory_space<smem>>
    %319 = vector.broadcast %318 : f32 to vector<8x256xf32>
    %320 = arith.mulf %191, %319 : vector<8x256xf32>
    %321 = arith.addf %317, %320 : vector<8x256xf32>
    %c10_54 = arith.constant 10 : index
    %322 = memref.load %arg4[%c10_54] : memref<24xf32, #tpu.memory_space<smem>>
    %323 = vector.broadcast %322 : f32 to vector<8x256xf32>
    %324 = arith.mulf %232, %323 : vector<8x256xf32>
    %325 = arith.addf %321, %324 : vector<8x256xf32>
    %c11_55 = arith.constant 11 : index
    %326 = memref.load %arg4[%c11_55] : memref<24xf32, #tpu.memory_space<smem>>
    %327 = vector.broadcast %326 : f32 to vector<8x256xf32>
    %328 = arith.mulf %273, %327 : vector<8x256xf32>
    %329 = arith.addf %325, %328 : vector<8x256xf32>
    %c1_56 = arith.constant 1 : index
    %330 = memref.load %arg5[%c1_56] : memref<4xf32, #tpu.memory_space<smem>>
    %331 = vector.broadcast %330 : f32 to vector<8x256xf32>
    %332 = arith.addf %329, %331 : vector<8x256xf32>
    %cst_57 = arith.constant 5.000000e-01 : f32
    %333 = vector.broadcast %cst_57 : f32 to vector<8x256xf32>
    %334 = arith.mulf %333, %332 : vector<8x256xf32>
    %335 = math.tanh %334 : vector<8x256xf32>
    %cst_58 = arith.constant 5.000000e-01 : f32
    %336 = vector.broadcast %cst_58 : f32 to vector<8x256xf32>
    %337 = arith.mulf %336, %335 : vector<8x256xf32>
    %cst_59 = arith.constant 5.000000e-01 : f32
    %338 = vector.broadcast %cst_59 : f32 to vector<8x256xf32>
    %339 = arith.addf %337, %338 : vector<8x256xf32>
    %c12_60 = arith.constant 12 : index
    %340 = memref.load %arg4[%c12_60] : memref<24xf32, #tpu.memory_space<smem>>
    %341 = vector.broadcast %340 : f32 to vector<8x256xf32>
    %342 = arith.mulf %68, %341 : vector<8x256xf32>
    %c13_61 = arith.constant 13 : index
    %343 = memref.load %arg4[%c13_61] : memref<24xf32, #tpu.memory_space<smem>>
    %344 = vector.broadcast %343 : f32 to vector<8x256xf32>
    %345 = arith.mulf %109, %344 : vector<8x256xf32>
    %346 = arith.addf %342, %345 : vector<8x256xf32>
    %c14_62 = arith.constant 14 : index
    %347 = memref.load %arg4[%c14_62] : memref<24xf32, #tpu.memory_space<smem>>
    %348 = vector.broadcast %347 : f32 to vector<8x256xf32>
    %349 = arith.mulf %150, %348 : vector<8x256xf32>
    %350 = arith.addf %346, %349 : vector<8x256xf32>
    %c15_63 = arith.constant 15 : index
    %351 = memref.load %arg4[%c15_63] : memref<24xf32, #tpu.memory_space<smem>>
    %352 = vector.broadcast %351 : f32 to vector<8x256xf32>
    %353 = arith.mulf %191, %352 : vector<8x256xf32>
    %354 = arith.addf %350, %353 : vector<8x256xf32>
    %c16_64 = arith.constant 16 : index
    %355 = memref.load %arg4[%c16_64] : memref<24xf32, #tpu.memory_space<smem>>
    %356 = vector.broadcast %355 : f32 to vector<8x256xf32>
    %357 = arith.mulf %232, %356 : vector<8x256xf32>
    %358 = arith.addf %354, %357 : vector<8x256xf32>
    %c17_65 = arith.constant 17 : index
    %359 = memref.load %arg4[%c17_65] : memref<24xf32, #tpu.memory_space<smem>>
    %360 = vector.broadcast %359 : f32 to vector<8x256xf32>
    %361 = arith.mulf %273, %360 : vector<8x256xf32>
    %362 = arith.addf %358, %361 : vector<8x256xf32>
    %c2_66 = arith.constant 2 : index
    %363 = memref.load %arg5[%c2_66] : memref<4xf32, #tpu.memory_space<smem>>
    %364 = vector.broadcast %363 : f32 to vector<8x256xf32>
    %365 = arith.addf %362, %364 : vector<8x256xf32>
    %cst_67 = arith.constant 5.000000e-01 : f32
    %366 = vector.broadcast %cst_67 : f32 to vector<8x256xf32>
    %367 = arith.mulf %366, %365 : vector<8x256xf32>
    %368 = math.tanh %367 : vector<8x256xf32>
    %cst_68 = arith.constant 5.000000e-01 : f32
    %369 = vector.broadcast %cst_68 : f32 to vector<8x256xf32>
    %370 = arith.mulf %369, %368 : vector<8x256xf32>
    %cst_69 = arith.constant 5.000000e-01 : f32
    %371 = vector.broadcast %cst_69 : f32 to vector<8x256xf32>
    %372 = arith.addf %370, %371 : vector<8x256xf32>
    %c18_70 = arith.constant 18 : index
    %373 = memref.load %arg4[%c18_70] : memref<24xf32, #tpu.memory_space<smem>>
    %374 = vector.broadcast %373 : f32 to vector<8x256xf32>
    %375 = arith.mulf %68, %374 : vector<8x256xf32>
    %c19_71 = arith.constant 19 : index
    %376 = memref.load %arg4[%c19_71] : memref<24xf32, #tpu.memory_space<smem>>
    %377 = vector.broadcast %376 : f32 to vector<8x256xf32>
    %378 = arith.mulf %109, %377 : vector<8x256xf32>
    %379 = arith.addf %375, %378 : vector<8x256xf32>
    %c20_72 = arith.constant 20 : index
    %380 = memref.load %arg4[%c20_72] : memref<24xf32, #tpu.memory_space<smem>>
    %381 = vector.broadcast %380 : f32 to vector<8x256xf32>
    %382 = arith.mulf %150, %381 : vector<8x256xf32>
    %383 = arith.addf %379, %382 : vector<8x256xf32>
    %c21_73 = arith.constant 21 : index
    %384 = memref.load %arg4[%c21_73] : memref<24xf32, #tpu.memory_space<smem>>
    %385 = vector.broadcast %384 : f32 to vector<8x256xf32>
    %386 = arith.mulf %191, %385 : vector<8x256xf32>
    %387 = arith.addf %383, %386 : vector<8x256xf32>
    %c22_74 = arith.constant 22 : index
    %388 = memref.load %arg4[%c22_74] : memref<24xf32, #tpu.memory_space<smem>>
    %389 = vector.broadcast %388 : f32 to vector<8x256xf32>
    %390 = arith.mulf %232, %389 : vector<8x256xf32>
    %391 = arith.addf %387, %390 : vector<8x256xf32>
    %c23_75 = arith.constant 23 : index
    %392 = memref.load %arg4[%c23_75] : memref<24xf32, #tpu.memory_space<smem>>
    %393 = vector.broadcast %392 : f32 to vector<8x256xf32>
    %394 = arith.mulf %273, %393 : vector<8x256xf32>
    %395 = arith.addf %391, %394 : vector<8x256xf32>
    %c3_76 = arith.constant 3 : index
    %396 = memref.load %arg5[%c3_76] : memref<4xf32, #tpu.memory_space<smem>>
    %397 = vector.broadcast %396 : f32 to vector<8x256xf32>
    %398 = arith.addf %395, %397 : vector<8x256xf32>
    %cst_77 = arith.constant 5.000000e-01 : f32
    %399 = vector.broadcast %cst_77 : f32 to vector<8x256xf32>
    %400 = arith.mulf %399, %398 : vector<8x256xf32>
    %401 = math.tanh %400 : vector<8x256xf32>
    %cst_78 = arith.constant 5.000000e-01 : f32
    %402 = vector.broadcast %cst_78 : f32 to vector<8x256xf32>
    %403 = arith.mulf %402, %401 : vector<8x256xf32>
    %cst_79 = arith.constant 5.000000e-01 : f32
    %404 = vector.broadcast %cst_79 : f32 to vector<8x256xf32>
    %405 = arith.addf %403, %404 : vector<8x256xf32>
    %c0_80 = arith.constant 0 : index
    %406 = memref.load %arg6[%c0_80] : memref<4xf32, #tpu.memory_space<smem>>
    %407 = vector.broadcast %406 : f32 to vector<8x256xf32>
    %408 = arith.mulf %306, %407 : vector<8x256xf32>
    %c1_81 = arith.constant 1 : index
    %409 = memref.load %arg6[%c1_81] : memref<4xf32, #tpu.memory_space<smem>>
    %410 = vector.broadcast %409 : f32 to vector<8x256xf32>
    %411 = arith.mulf %339, %410 : vector<8x256xf32>
    %412 = arith.addf %408, %411 : vector<8x256xf32>
    %c2_82 = arith.constant 2 : index
    %413 = memref.load %arg6[%c2_82] : memref<4xf32, #tpu.memory_space<smem>>
    %414 = vector.broadcast %413 : f32 to vector<8x256xf32>
    %415 = arith.mulf %372, %414 : vector<8x256xf32>
    %416 = arith.addf %412, %415 : vector<8x256xf32>
    %c3_83 = arith.constant 3 : index
    %417 = memref.load %arg6[%c3_83] : memref<4xf32, #tpu.memory_space<smem>>
    %418 = vector.broadcast %417 : f32 to vector<8x256xf32>
    %419 = arith.mulf %405, %418 : vector<8x256xf32>
    %420 = arith.addf %416, %419 : vector<8x256xf32>
    %c0_84 = arith.constant 0 : index
    %421 = memref.load %arg7[%c0_84] : memref<1xf32, #tpu.memory_space<smem>>
    %422 = vector.broadcast %421 : f32 to vector<8x256xf32>
    %423 = arith.addf %420, %422 : vector<8x256xf32>
    %cst_85 = arith.constant 5.000000e-01 : f32
    %424 = vector.broadcast %cst_85 : f32 to vector<8x256xf32>
    %425 = arith.mulf %424, %423 : vector<8x256xf32>
    %426 = math.tanh %425 : vector<8x256xf32>
    %cst_86 = arith.constant 5.000000e-01 : f32
    %427 = vector.broadcast %cst_86 : f32 to vector<8x256xf32>
    %428 = arith.mulf %427, %426 : vector<8x256xf32>
    %cst_87 = arith.constant 5.000000e-01 : f32
    %429 = vector.broadcast %cst_87 : f32 to vector<8x256xf32>
    %430 = arith.addf %428, %429 : vector<8x256xf32>
    %c0_88 = arith.constant 0 : index
    %431 = arith.index_cast %3 : i32 to index
    %432 = vector.load %arg8[%c0_88, %431] : memref<8x256xf32, #tpu.memory_space<vmem>>, vector<8x256xf32>
    tpu.vector_store %arg8[%c0_88, %431], %430 {strides = array<i32>} : memref<8x256xf32, #tpu.memory_space<vmem>>, vector<8x256xf32>,
    %c1_i32_89 = arith.constant 1 : i32
    return
  }
  func.func @transform_0(%arg0: i32) -> (i32, i32, i32) {
    %c0_i32 = arith.constant 0 : i32
    %c0_i32_0 = arith.constant 0 : i32
    %c0_i32_1 = arith.constant 0 : i32
    return %c0_i32, %c0_i32_0, %arg0 : i32, i32, i32
  }
  func.func @transform_1(%arg0: i32) -> i32 {
    %c0_i32 = arith.constant 0 : i32
    %c0_i32_0 = arith.constant 0 : i32
    return %c0_i32 : i32
  }
  func.func @transform_2(%arg0: i32) -> i32 {
    %c0_i32 = arith.constant 0 : i32
    %c0_i32_0 = arith.constant 0 : i32
    return %c0_i32 : i32
  }
  func.func @transform_3(%arg0: i32) -> i32 {
    %c0_i32 = arith.constant 0 : i32
    %c0_i32_0 = arith.constant 0 : i32
    return %c0_i32 : i32
  }
  func.func @transform_4(%arg0: i32) -> i32 {
    %c0_i32 = arith.constant 0 : i32
    %c0_i32_0 = arith.constant 0 : i32
    return %c0_i32 : i32
  }
  func.func @transform_5(%arg0: i32) -> i32 {
    %c0_i32 = arith.constant 0 : i32
    %c0_i32_0 = arith.constant 0 : i32
    return %c0_i32 : i32
  }
  func.func @transform_6(%arg0: i32) -> i32 {
    %c0_i32 = arith.constant 0 : i32
    %c0_i32_0 = arith.constant 0 : i32
    return %c0_i32 : i32
  }
  func.func @transform_7(%arg0: i32) -> (i32, i32) {
    %c0_i32 = arith.constant 0 : i32
    %c0_i32_0 = arith.constant 0 : i32
    return %c0_i32, %arg0 : i32, i32
  }
}

</mosaic_0001>

<llo_original>
// kernel: wide_deep_forward.1
$region0: #{wide_deep_forward.1}
  #allocation0 [shape = 'u32[]', space=smem, size = 0x4, offset = 0x4, fixed_abs, tag = 'smem constant byte address 0x4 - core index']
  #allocation1 [shape = 'u32[144,128]{1,0:T(1,128)}', space=vmem, size = 0x12000, scoped, tag = 'internal scratch']
  #allocation2 [shape = 'f32[1]{0:T(128)S(6)}', space=smem, size = 0x200, scoped, tag = 'scoped memory for wide_deep_forward.1']
  %s0 = inlined_call_operand.vmem [shape: f32[8,8,256], index: 0, kind: input, shape index: {}]
  %s1 = inlined_call_operand.vmem [shape: f32[48], index: 1, kind: input, shape index: {}]
  %s2 = inlined_call_operand.vmem [shape: f32[6], index: 2, kind: input, shape index: {}]
  %s3 = inlined_call_operand.vmem [shape: f32[24], index: 3, kind: input, shape index: {}]
  %s4 = inlined_call_operand.vmem [shape: f32[4], index: 4, kind: input, shape index: {}]
  %s5 = inlined_call_operand.vmem [shape: f32[4], index: 5, kind: input, shape index: {}]
  %s6 = inlined_call_operand.<no memory space> [shape: f32[1], index: 6, kind: input, shape index: {}]
  %s7 = inlined_call_operand.vmem [shape: f32[8,256], index: 7, kind: output, shape index: {}]
  %s8 = sld [smem:[#allocation0]]
  $region58: #{wide_deep_forward.1} parent=0
    _
  %s10 = ssub.s32 1, %s8
  %s11 = scalar_select 0, %s10, %s8
  %12 = sst [smem:[#allocation2]] %s6
  $region1: #{wide_deep_forward.1} parent=0
    #allocation3 [shape = 'u8[512]{0}', space=smem, size = 0x200, scoped, tag = 'input window, operand 1, single buffered']
    #allocation4 [shape = 's32[1]{0}', space=sflag, size = 0x4, scoped, tag = 'scoped memory for wide_deep_forward.1']
    #allocation5 [shape = 'u8[512]{0}', space=smem, size = 0x200, scoped, tag = 'input window, operand 2, single buffered']
    #allocation6 [shape = 's32[1]{0}', space=sflag, size = 0x4, scoped, tag = 'scoped memory for wide_deep_forward.1']
    #allocation7 [shape = 'u8[512]{0}', space=smem, size = 0x200, scoped, tag = 'input window, operand 3, single buffered']
    #allocation8 [shape = 'u8[512]{0}', space=smem, size = 0x200, scoped, tag = 'input window, operand 4, single buffered']
    #allocation9 [shape = 's32[1]{0}', space=sflag, size = 0x4, scoped, tag = 'scoped memory for wide_deep_forward.1']
    #allocation10 [shape = 'u8[512]{0}', space=smem, size = 0x200, scoped, tag = 'input window, operand 5, single buffered']
    %13 = vsyncpa [#allocation4], 0
    %14 = vsyncpa [#allocation6], 0
    %15 = vsyncpa [#allocation9], 0
    // Predicated region
    $region2: #{wide_deep_forward.1} parent=1 // pred_check
      _
    $region3: #{wide_deep_forward.1} parent=1 // pred_check_branch
      %17 = sbr.rel (0) target = $region5
    $region4: #{wide_deep_forward.1} parent=1 // pred_region
      _
    $region5: #{wide_deep_forward.1} parent=1 // pred_fallthru
      _
    // Predicated region
    $region6: #{wide_deep_forward.1} parent=1 // pred_check
      _
    $region7: #{wide_deep_forward.1} parent=1 // pred_check_branch
      %19 = sbr.rel (0) target = $region9
    $region8: #{wide_deep_forward.1} parent=1 // pred_region
      %s21 = ssub.s32 16, 16
      %22 = vsyncadd [#allocation4], %s21
      %s24 = sshll.u32 %s1, 4
      %s25 = int_to_ptr.vmem [resolvable:$true] %s24
      %27 = dma.vmem_to_smem %s25, 16, [#allocation3], [#allocation4]
    $region9: #{wide_deep_forward.1} parent=1 // pred_fallthru
      _
    // Predicated region
    $region10: #{wide_deep_forward.1} parent=1 // pred_check
      _
    $region11: #{wide_deep_forward.1} parent=1 // pred_check_branch
      %29 = sbr.rel (0) target = $region13
    $region12: #{wide_deep_forward.1} parent=1 // pred_region
      %s31 = ssub.s32 16, 16
      %32 = vsyncadd [#allocation6], %s31
      %s34 = sshll.u32 %s2, 4
      %s35 = int_to_ptr.vmem [resolvable:$true] %s34
      %37 = dma.vmem_to_smem %s35, 16, [#allocation5], [#allocation6]
    $region13: #{wide_deep_forward.1} parent=1 // pred_fallthru
      _
    // Predicated region
    $region14: #{wide_deep_forward.1} parent=1 // pred_check
      _
    $region15: #{wide_deep_forward.1} parent=1 // pred_check_branch
      %39 = sbr.rel (0) target = $region17
    $region16: #{wide_deep_forward.1} parent=1 // pred_region
      %s41 = ssub.s32 16, 16
      %42 = vsyncadd [#allocation6], %s41
      %s44 = sshll.u32 %s3, 4
      %s45 = int_to_ptr.vmem [resolvable:$true] %s44
      %47 = dma.vmem_to_smem %s45, 16, [#allocation7], [#allocation6]
    $region17: #{wide_deep_forward.1} parent=1 // pred_fallthru
      _
    // Predicated region
    $region18: #{wide_deep_forward.1} parent=1 // pred_check
      _
    $region19: #{wide_deep_forward.1} parent=1 // pred_check_branch
      %49 = sbr.rel (0) target = $region21
    $region20: #{wide_deep_forward.1} parent=1 // pred_region
      %s51 = ssub.s32 16, 16
      %52 = vsyncadd [#allocation9], %s51
      %s54 = sshll.u32 %s4, 4
      %s55 = int_to_ptr.vmem [resolvable:$true] %s54
      %57 = dma.vmem_to_smem %s55, 16, [#allocation8], [#allocation9]
    $region21: #{wide_deep_forward.1} parent=1 // pred_fallthru
      _
    // Predicated region
    $region22: #{wide_deep_forward.1} parent=1 // pred_check
      _
    $region23: #{wide_deep_forward.1} parent=1 // pred_check_branch
      %59 = sbr.rel (0) target = $region25
    $region24: #{wide_deep_forward.1} parent=1 // pred_region
      %s61 = ssub.s32 16, 16
      %62 = vsyncadd [#allocation9], %s61
      %s64 = sshll.u32 %s5, 4
      %s65 = int_to_ptr.vmem [resolvable:$true] %s64
      %67 = dma.vmem_to_smem %s65, 16, [#allocation10], [#allocation9]
    $region25: #{wide_deep_forward.1} parent=1 // pred_fallthru
      _
    // Predicated region
    $region26: #{wide_deep_forward.1} parent=1 // pred_check
      _
    $region27: #{wide_deep_forward.1} parent=1 // pred_check_branch
      %69 = sbr.rel (0) target = $region29
    $region28: #{wide_deep_forward.1} parent=1 // pred_region
      _
    $region29: #{wide_deep_forward.1} parent=1 // pred_fallthru
      _
    // Predicated region
    $region30: #{wide_deep_forward.1} parent=1 // pred_check
      _
    $region31: #{wide_deep_forward.1} parent=1 // pred_check_branch
      %71 = sbr.rel (0) target = $region33
    $region32: #{wide_deep_forward.1} parent=1 // pred_region
      %72 = dma.done [#allocation4], 16
    $region33: #{wide_deep_forward.1} parent=1 // pred_fallthru
      _
    // Predicated region
    $region34: #{wide_deep_forward.1} parent=1 // pred_check
      _
    $region35: #{wide_deep_forward.1} parent=1 // pred_check_branch
      %74 = sbr.rel (0) target = $region37
    $region36: #{wide_deep_forward.1} parent=1 // pred_region
      %75 = dma.done [#allocation6], 16
    $region37: #{wide_deep_forward.1} parent=1 // pred_fallthru
      _
    // Predicated region
    $region38: #{wide_deep_forward.1} parent=1 // pred_check
      _
    $region39: #{wide_deep_forward.1} parent=1 // pred_check_branch
      %77 = sbr.rel (0) target = $region41
    $region40: #{wide_deep_forward.1} parent=1 // pred_region
      %78 = dma.done [#allocation6], 16
    $region41: #{wide_deep_forward.1} parent=1 // pred_fallthru
      _
    // Predicated region
    $region42: #{wide_deep_forward.1} parent=1 // pred_check
      _
    $region43: #{wide_deep_forward.1} parent=1 // pred_check_branch
      %80 = sbr.rel (0) target = $region45
    $region44: #{wide_deep_forward.1} parent=1 // pred_region
      %81 = dma.done [#allocation9], 16
    $region45: #{wide_deep_forward.1} parent=1 // pred_fallthru
      _
    // Predicated region
    $region46: #{wide_deep_forward.1} parent=1 // pred_check
      _
    $region47: #{wide_deep_forward.1} parent=1 // pred_check_branch
      %83 = sbr.rel (0) target = $region49
    $region48: #{wide_deep_forward.1} parent=1 // pred_region
      %84 = dma.done [#allocation9], 16
    $region49: #{wide_deep_forward.1} parent=1 // pred_fallthru
      _
    %85 = sfence
    %v86 = vld [vmem:[%s0] sm:$0xff]
    %v87 = vld [vmem:[%s0 + $0x8] sm:$0xff]
    %s88 = sadd.s32 0, 2
    %s89 = smul.addr %s88, 8
    %s90 = scalar_lea.vmem %s0, %s89
    %v91 = vld [vmem:[%s90] sm:$0xff]
    %v92 = vld [vmem:[%s90 + $0x8] sm:$0xff]
    %s93 = sadd.s32 0, 4
    %s94 = smul.addr %s93, 8
    %s95 = scalar_lea.vmem %s0, %s94
    %v96 = vld [vmem:[%s95] sm:$0xff]
    %v97 = vld [vmem:[%s95 + $0x8] sm:$0xff]
    %s98 = sadd.s32 0, 6
    %s99 = smul.addr %s98, 8
    %s100 = scalar_lea.vmem %s0, %s99
    %v101 = vld [vmem:[%s100] sm:$0xff]
    %v102 = vld [vmem:[%s100 + $0x8] sm:$0xff]
    %s103 = sadd.s32 0, 8
    %s104 = smul.addr %s103, 8
    %s105 = scalar_lea.vmem %s0, %s104
    %v106 = vld [vmem:[%s105] sm:$0xff]
    %v107 = vld [vmem:[%s105 + $0x8] sm:$0xff]
    %s108 = sadd.s32 0, 10
    %s109 = smul.addr %s108, 8
    %s110 = scalar_lea.vmem %s0, %s109
    %v111 = vld [vmem:[%s110] sm:$0xff]
    %v112 = vld [vmem:[%s110 + $0x8] sm:$0xff]
    %s113 = sadd.s32 0, 12
    %s114 = smul.addr %s113, 8
    %s115 = scalar_lea.vmem %s0, %s114
    %v116 = vld [vmem:[%s115] sm:$0xff]
    %v117 = vld [vmem:[%s115 + $0x8] sm:$0xff]
    %s118 = sadd.s32 0, 14
    %s119 = smul.addr %s118, 8
    %s120 = scalar_lea.vmem %s0, %s119
    %v121 = vld [vmem:[%s120] sm:$0xff]
    %v122 = vld [vmem:[%s120 + $0x8] sm:$0xff]
    %s123 = sld [smem:[#allocation3]]
    %v124 = vstv %s123
    %v125 = vmul.f32 %v86, %v124
    %v126 = vmul.f32 %v87, %v124
    %s127 = sld [smem:[#allocation3 + $0x1]]
    %v128 = vstv %s127
    %v129 = vmul.f32 %v91, %v128
    %v130 = vmul.f32 %v92, %v128
    %v131 = vadd.f32 %v125, %v129
    %v132 = vadd.f32 %v126, %v130
    %s133 = sld [smem:[#allocation3 + $0x2]]
    %v134 = vstv %s133
    %v135 = vmul.f32 %v96, %v134
    %v136 = vmul.f32 %v97, %v134
    %v137 = vadd.f32 %v131, %v135
    %v138 = vadd.f32 %v132, %v136
    %s139 = sld [smem:[#allocation3 + $0x3]]
    %v140 = vstv %s139
    %v141 = vmul.f32 %v101, %v140
    %v142 = vmul.f32 %v102, %v140
    %v143 = vadd.f32 %v137, %v141
    %v144 = vadd.f32 %v138, %v142
    %s145 = sld [smem:[#allocation3 + $0x4]]
    %v146 = vstv %s145
    %v147 = vmul.f32 %v106, %v146
    %v148 = vmul.f32 %v107, %v146
    %v149 = vadd.f32 %v143, %v147
    %v150 = vadd.f32 %v144, %v148
    %s151 = sld [smem:[#allocation3 + $0x5]]
    %v152 = vstv %s151
    %v153 = vmul.f32 %v111, %v152
    %v154 = vmul.f32 %v112, %v152
    %v155 = vadd.f32 %v149, %v153
    %v156 = vadd.f32 %v150, %v154
    %s157 = sld [smem:[#allocation3 + $0x6]]
    %v158 = vstv %s157
    %v159 = vmul.f32 %v116, %v158
    %v160 = vmul.f32 %v117, %v158
    %v161 = vadd.f32 %v155, %v159
    %v162 = vadd.f32 %v156, %v160
    %s163 = sld [smem:[#allocation3 + $0x7]]
    %v164 = vstv %s163
    %v165 = vmul.f32 %v121, %v164
    %v166 = vmul.f32 %v122, %v164
    %v167 = vadd.f32 %v161, %v165
    %v168 = vadd.f32 %v162, %v166
    %s169 = sld [smem:[#allocation5]]
    %v170 = vstv %s169
    %v171 = vadd.f32 %v167, %v170
    %v172 = vadd.f32 %v168, %v170
    %v173 = vmul.f32 %v171, 0.5
    %v174 = vmul.f32 %v172, 0.5
    %v175 = vtanh.pop %v173
    %v176 = vtanh.pop %v174
    %v177 = vmul.f32 %v175, 0.5
    %v178 = vmul.f32 %v176, 0.5
    %v179 = vadd.f32 %v177, 0.5
    %v180 = vadd.f32 %v178, 0.5
    %s181 = sld [smem:[#allocation3 + $0x8]]
    %v182 = vstv %s181
    %v183 = vmul.f32 %v86, %v182
    %v184 = vmul.f32 %v87, %v182
    %s185 = sld [smem:[#allocation3 + $0x9]]
    %v186 = vstv %s185
    %v187 = vmul.f32 %v91, %v186
    %v188 = vmul.f32 %v92, %v186
    %v189 = vadd.f32 %v183, %v187
    %v190 = vadd.f32 %v184, %v188
    %s191 = sld [smem:[#allocation3 + $0xa]]
    %v192 = vstv %s191
    %v193 = vmul.f32 %v96, %v192
    %v194 = vmul.f32 %v97, %v192
    %v195 = vadd.f32 %v189, %v193
    %v196 = vadd.f32 %v190, %v194
    %s197 = sld [smem:[#allocation3 + $0xb]]
    %v198 = vstv %s197
    %v199 = vmul.f32 %v101, %v198
    %v200 = vmul.f32 %v102, %v198
    %v201 = vadd.f32 %v195, %v199
    %v202 = vadd.f32 %v196, %v200
    %s203 = sld [smem:[#allocation3 + $0xc]]
    %v204 = vstv %s203
    %v205 = vmul.f32 %v106, %v204
    %v206 = vmul.f32 %v107, %v204
    %v207 = vadd.f32 %v201, %v205
    %v208 = vadd.f32 %v202, %v206
    %s209 = sld [smem:[#allocation3 + $0xd]]
    %v210 = vstv %s209
    %v211 = vmul.f32 %v111, %v210
    %v212 = vmul.f32 %v112, %v210
    %v213 = vadd.f32 %v207, %v211
    %v214 = vadd.f32 %v208, %v212
    %s215 = sld [smem:[#allocation3 + $0xe]]
    %v216 = vstv %s215
    %v217 = vmul.f32 %v116, %v216
    %v218 = vmul.f32 %v117, %v216
    %v219 = vadd.f32 %v213, %v217
    %v220 = vadd.f32 %v214, %v218
    %s221 = sld [smem:[#allocation3 + $0xf]]
    %v222 = vstv %s221
    %v223 = vmul.f32 %v121, %v222
    %v224 = vmul.f32 %v122, %v222
    %v225 = vadd.f32 %v219, %v223
    %v226 = vadd.f32 %v220, %v224
    %s227 = sld [smem:[#allocation5 + $0x1]]
    %v228 = vstv %s227
    %v229 = vadd.f32 %v225, %v228
    %v230 = vadd.f32 %v226, %v228
    %v231 = vmul.f32 %v229, 0.5
    %v232 = vmul.f32 %v230, 0.5
    %v233 = vtanh.pop %v231
    %v234 = vtanh.pop %v232
    %v235 = vmul.f32 %v233, 0.5
    %v236 = vmul.f32 %v234, 0.5
    %v237 = vadd.f32 %v235, 0.5
    %v238 = vadd.f32 %v236, 0.5
    %s239 = sld [smem:[#allocation3 + $0x10]]
    %v240 = vstv %s239
    %v241 = vmul.f32 %v86, %v240
    %v242 = vmul.f32 %v87, %v240
    %s243 = sld [smem:[#allocation3 + $0x11]]
    %v244 = vstv %s243
    %v245 = vmul.f32 %v91, %v244
    %v246 = vmul.f32 %v92, %v244
    %v247 = vadd.f32 %v241, %v245
    %v248 = vadd.f32 %v242, %v246
    %s249 = sld [smem:[#allocation3 + $0x12]]
    %v250 = vstv %s249
    %v251 = vmul.f32 %v96, %v250
    %v252 = vmul.f32 %v97, %v250
    %v253 = vadd.f32 %v247, %v251
    %v254 = vadd.f32 %v248, %v252
    %s255 = sld [smem:[#allocation3 + $0x13]]
    %v256 = vstv %s255
    %v257 = vmul.f32 %v101, %v256
    %v258 = vmul.f32 %v102, %v256
    %v259 = vadd.f32 %v253, %v257
    %v260 = vadd.f32 %v254, %v258
    %s261 = sld [smem:[#allocation3 + $0x14]]
    %v262 = vstv %s261
    %v263 = vmul.f32 %v106, %v262
    %v264 = vmul.f32 %v107, %v262
    %v265 = vadd.f32 %v259, %v263
    %v266 = vadd.f32 %v260, %v264
    %s267 = sld [smem:[#allocation3 + $0x15]]
    %v268 = vstv %s267
    %v269 = vmul.f32 %v111, %v268
    %v270 = vmul.f32 %v112, %v268
    %v271 = vadd.f32 %v265, %v269
    %v272 = vadd.f32 %v266, %v270
    %s273 = sld [smem:[#allocation3 + $0x16]]
    %v274 = vstv %s273
    %v275 = vmul.f32 %v116, %v274
    %v276 = vmul.f32 %v117, %v274
    %v277 = vadd.f32 %v271, %v275
    %v278 = vadd.f32 %v272, %v276
    %s279 = sld [smem:[#allocation3 + $0x17]]
    %v280 = vstv %s279
    %v281 = vmul.f32 %v121, %v280
    %v282 = vmul.f32 %v122, %v280
    %v283 = vadd.f32 %v277, %v281
    %v284 = vadd.f32 %v278, %v282
    %s285 = sld [smem:[#allocation5 + $0x2]]
    %v286 = vstv %s285
    %v287 = vadd.f32 %v283, %v286
    %v288 = vadd.f32 %v284, %v286
    %v289 = vmul.f32 %v287, 0.5
    %v290 = vmul.f32 %v288, 0.5
    %v291 = vtanh.pop %v289
    %v292 = vtanh.pop %v290
    %v293 = vmul.f32 %v291, 0.5
    %v294 = vmul.f32 %v292, 0.5
    %v295 = vadd.f32 %v293, 0.5
    %v296 = vadd.f32 %v294, 0.5
    %s297 = sld [smem:[#allocation3 + $0x18]]
    %v298 = vstv %s297
    %v299 = vmul.f32 %v86, %v298
    %v300 = vmul.f32 %v87, %v298
    %s301 = sld [smem:[#allocation3 + $0x19]]
    %v302 = vstv %s301
    %v303 = vmul.f32 %v91, %v302
    %v304 = vmul.f32 %v92, %v302
    %v305 = vadd.f32 %v299, %v303
    %v306 = vadd.f32 %v300, %v304
    %s307 = sld [smem:[#allocation3 + $0x1a]]
    %v308 = vstv %s307
    %v309 = vmul.f32 %v96, %v308
    %v310 = vmul.f32 %v97, %v308
    %v311 = vadd.f32 %v305, %v309
    %v312 = vadd.f32 %v306, %v310
    %s313 = sld [smem:[#allocation3 + $0x1b]]
    %v314 = vstv %s313
    %v315 = vmul.f32 %v101, %v314
    %v316 = vmul.f32 %v102, %v314
    %v317 = vadd.f32 %v311, %v315
    %v318 = vadd.f32 %v312, %v316
    %s319 = sld [smem:[#allocation3 + $0x1c]]
    %v320 = vstv %s319
    %v321 = vmul.f32 %v106, %v320
    %v322 = vmul.f32 %v107, %v320
    %v323 = vadd.f32 %v317, %v321
    %v324 = vadd.f32 %v318, %v322
    %s325 = sld [smem:[#allocation3 + $0x1d]]
    %v326 = vstv %s325
    %v327 = vmul.f32 %v111, %v326
    %v328 = vmul.f32 %v112, %v326
    %v329 = vadd.f32 %v323, %v327
    %v330 = vadd.f32 %v324, %v328
    %s331 = sld [smem:[#allocation3 + $0x1e]]
    %v332 = vstv %s331
    %v333 = vmul.f32 %v116, %v332
    %v334 = vmul.f32 %v117, %v332
    %v335 = vadd.f32 %v329, %v333
    %v336 = vadd.f32 %v330, %v334
    %s337 = sld [smem:[#allocation3 + $0x1f]]
    %v338 = vstv %s337
    %v339 = vmul.f32 %v121, %v338
    %v340 = vmul.f32 %v122, %v338
    %v341 = vadd.f32 %v335, %v339
    %v342 = vadd.f32 %v336, %v340
    %s343 = sld [smem:[#allocation5 + $0x3]]
    %v344 = vstv %s343
    %v345 = vadd.f32 %v341, %v344
    %v346 = vadd.f32 %v342, %v344
    %v347 = vmul.f32 %v345, 0.5
    %v348 = vmul.f32 %v346, 0.5
    %v349 = vtanh.pop %v347
    %v350 = vtanh.pop %v348
    %v351 = vmul.f32 %v349, 0.5
    %v352 = vmul.f32 %v350, 0.5
    %v353 = vadd.f32 %v351, 0.5
    %v354 = vadd.f32 %v352, 0.5
    %s355 = sld [smem:[#allocation3 + $0x20]]
    %v356 = vstv %s355
    %v357 = vmul.f32 %v86, %v356
    %v358 = vmul.f32 %v87, %v356
    %s359 = sld [smem:[#allocation3 + $0x21]]
    %v360 = vstv %s359
    %v361 = vmul.f32 %v91, %v360
    %v362 = vmul.f32 %v92, %v360
    %v363 = vadd.f32 %v357, %v361
    %v364 = vadd.f32 %v358, %v362
    %s365 = sld [smem:[#allocation3 + $0x22]]
    %v366 = vstv %s365
    %v367 = vmul.f32 %v96, %v366
    %v368 = vmul.f32 %v97, %v366
    %v369 = vadd.f32 %v363, %v367
    %v370 = vadd.f32 %v364, %v368
    %s371 = sld [smem:[#allocation3 + $0x23]]
    %v372 = vstv %s371
    %v373 = vmul.f32 %v101, %v372
    %v374 = vmul.f32 %v102, %v372
    %v375 = vadd.f32 %v369, %v373
    %v376 = vadd.f32 %v370, %v374
    %s377 = sld [smem:[#allocation3 + $0x24]]
    %v378 = vstv %s377
    %v379 = vmul.f32 %v106, %v378
    %v380 = vmul.f32 %v107, %v378
    %v381 = vadd.f32 %v375, %v379
    %v382 = vadd.f32 %v376, %v380
    %s383 = sld [smem:[#allocation3 + $0x25]]
    %v384 = vstv %s383
    %v385 = vmul.f32 %v111, %v384
    %v386 = vmul.f32 %v112, %v384
    %v387 = vadd.f32 %v381, %v385
    %v388 = vadd.f32 %v382, %v386
    %s389 = sld [smem:[#allocation3 + $0x26]]
    %v390 = vstv %s389
    %v391 = vmul.f32 %v116, %v390
    %v392 = vmul.f32 %v117, %v390
    %v393 = vadd.f32 %v387, %v391
    %v394 = vadd.f32 %v388, %v392
    %s395 = sld [smem:[#allocation3 + $0x27]]
    %v396 = vstv %s395
    %v397 = vmul.f32 %v121, %v396
    %v398 = vmul.f32 %v122, %v396
    %v399 = vadd.f32 %v393, %v397
    %v400 = vadd.f32 %v394, %v398
    %s401 = sld [smem:[#allocation5 + $0x4]]
    %v402 = vstv %s401
    %v403 = vadd.f32 %v399, %v402
    %v404 = vadd.f32 %v400, %v402
    %v405 = vmul.f32 %v403, 0.5
    %v406 = vmul.f32 %v404, 0.5
    %v407 = vtanh.pop %v405
    %v408 = vtanh.pop %v406
    %v409 = vmul.f32 %v407, 0.5
    %v410 = vmul.f32 %v408, 0.5
    %v411 = vadd.f32 %v409, 0.5
    %v412 = vadd.f32 %v410, 0.5
    %s413 = sld [smem:[#allocation3 + $0x28]]
    %v414 = vstv %s413
    %v415 = vmul.f32 %v86, %v414
    %v416 = vmul.f32 %v87, %v414
    %s417 = sld [smem:[#allocation3 + $0x29]]
    %v418 = vstv %s417
    %v419 = vmul.f32 %v91, %v418
    %v420 = vmul.f32 %v92, %v418
    %v421 = vadd.f32 %v415, %v419
    %v422 = vadd.f32 %v416, %v420
    %s423 = sld [smem:[#allocation3 + $0x2a]]
    %v424 = vstv %s423
    %v425 = vmul.f32 %v96, %v424
    %v426 = vmul.f32 %v97, %v424
    %v427 = vadd.f32 %v421, %v425
    %v428 = vadd.f32 %v422, %v426
    %s429 = sld [smem:[#allocation3 + $0x2b]]
    %v430 = vstv %s429
    %v431 = vmul.f32 %v101, %v430
    %v432 = vmul.f32 %v102, %v430
    %v433 = vadd.f32 %v427, %v431
    %v434 = vadd.f32 %v428, %v432
    %s435 = sld [smem:[#allocation3 + $0x2c]]
    %v436 = vstv %s435
    %v437 = vmul.f32 %v106, %v436
    %v438 = vmul.f32 %v107, %v436
    %v439 = vadd.f32 %v433, %v437
    %v440 = vadd.f32 %v434, %v438
    %s441 = sld [smem:[#allocation3 + $0x2d]]
    %v442 = vstv %s441
    %v443 = vmul.f32 %v111, %v442
    %v444 = vmul.f32 %v112, %v442
    %v445 = vadd.f32 %v439, %v443
    %v446 = vadd.f32 %v440, %v444
    %s447 = sld [smem:[#allocation3 + $0x2e]]
    %v448 = vstv %s447
    %v449 = vmul.f32 %v116, %v448
    %v450 = vmul.f32 %v117, %v448
    %v451 = vadd.f32 %v445, %v449
    %v452 = vadd.f32 %v446, %v450
    %s453 = sld [smem:[#allocation3 + $0x2f]]
    %v454 = vstv %s453
    %v455 = vmul.f32 %v121, %v454
    %v456 = vmul.f32 %v122, %v454
    %v457 = vadd.f32 %v451, %v455
    %v458 = vadd.f32 %v452, %v456
    %s459 = sld [smem:[#allocation5 + $0x5]]
    %v460 = vstv %s459
    %v461 = vadd.f32 %v457, %v460
    %v462 = vadd.f32 %v458, %v460
    %v463 = vmul.f32 %v461, 0.5
    %v464 = vmul.f32 %v462, 0.5
    %v465 = vtanh.pop %v463
    %v466 = vtanh.pop %v464
    %v467 = vmul.f32 %v465, 0.5
    %v468 = vmul.f32 %v466, 0.5
    %v469 = vadd.f32 %v467, 0.5
    %v470 = vadd.f32 %v468, 0.5
    %s471 = sld [smem:[#allocation7]]
    %v472 = vstv %s471
    %v473 = vmul.f32 %v179, %v472
    %v474 = vmul.f32 %v180, %v472
    %s475 = sld [smem:[#allocation7 + $0x1]]
    %v476 = vstv %s475
    %v477 = vmul.f32 %v237, %v476
    %v478 = vmul.f32 %v238, %v476
    %v479 = vadd.f32 %v473, %v477
    %v480 = vadd.f32 %v474, %v478
    %s481 = sld [smem:[#allocation7 + $0x2]]
    %v482 = vstv %s481
    %v483 = vmul.f32 %v295, %v482
    %v484 = vmul.f32 %v296, %v482
    %v485 = vadd.f32 %v479, %v483
    %v486 = vadd.f32 %v480, %v484
    %s487 = sld [smem:[#allocation7 + $0x3]]
    %v488 = vstv %s487
    %v489 = vmul.f32 %v353, %v488
    %v490 = vmul.f32 %v354, %v488
    %v491 = vadd.f32 %v485, %v489
    %v492 = vadd.f32 %v486, %v490
    %s493 = sld [smem:[#allocation7 + $0x4]]
    %v494 = vstv %s493
    %v495 = vmul.f32 %v411, %v494
    %v496 = vmul.f32 %v412, %v494
    %v497 = vadd.f32 %v491, %v495
    %v498 = vadd.f32 %v492, %v496
    %s499 = sld [smem:[#allocation7 + $0x5]]
    %v500 = vstv %s499
    %v501 = vmul.f32 %v469, %v500
    %v502 = vmul.f32 %v470, %v500
    %v503 = vadd.f32 %v497, %v501
    %v504 = vadd.f32 %v498, %v502
    %s505 = sld [smem:[#allocation8]]
    %v506 = vstv %s505
    %v507 = vadd.f32 %v503, %v506
    %v508 = vadd.f32 %v504, %v506
    %v509 = vmul.f32 %v507, 0.5
    %v510 = vmul.f32 %v508, 0.5
    %v511 = vtanh.pop %v509
    %v512 = vtanh.pop %v510
    %v513 = vmul.f32 %v511, 0.5
    %v514 = vmul.f32 %v512, 0.5
    %v515 = vadd.f32 %v513, 0.5
    %v516 = vadd.f32 %v514, 0.5
    %s517 = sld [smem:[#allocation7 + $0x6]]
    %v518 = vstv %s517
    %v519 = vmul.f32 %v179, %v518
    %v520 = vmul.f32 %v180, %v518
    %s521 = sld [smem:[#allocation7 + $0x7]]
    %v522 = vstv %s521
    %v523 = vmul.f32 %v237, %v522
    %v524 = vmul.f32 %v238, %v522
    %v525 = vadd.f32 %v519, %v523
    %v526 = vadd.f32 %v520, %v524
    %s527 = sld [smem:[#allocation7 + $0x8]]
    %v528 = vstv %s527
    %v529 = vmul.f32 %v295, %v528
    %v530 = vmul.f32 %v296, %v528
    %v531 = vadd.f32 %v525, %v529
    %v532 = vadd.f32 %v526, %v530
    %s533 = sld [smem:[#allocation7 + $0x9]]
    %v534 = vstv %s533
    %v535 = vmul.f32 %v353, %v534
    %v536 = vmul.f32 %v354, %v534
    %v537 = vadd.f32 %v531, %v535
    %v538 = vadd.f32 %v532, %v536
    %s539 = sld [smem:[#allocation7 + $0xa]]
    %v540 = vstv %s539
    %v541 = vmul.f32 %v411, %v540
    %v542 = vmul.f32 %v412, %v540
    %v543 = vadd.f32 %v537, %v541
    %v544 = vadd.f32 %v538, %v542
    %s545 = sld [smem:[#allocation7 + $0xb]]
    %v546 = vstv %s545
    %v547 = vmul.f32 %v469, %v546
    %v548 = vmul.f32 %v470, %v546
    %v549 = vadd.f32 %v543, %v547
    %v550 = vadd.f32 %v544, %v548
    %s551 = sld [smem:[#allocation8 + $0x1]]
    %v552 = vstv %s551
    %v553 = vadd.f32 %v549, %v552
    %v554 = vadd.f32 %v550, %v552
    %v555 = vmul.f32 %v553, 0.5
    %v556 = vmul.f32 %v554, 0.5
    %v557 = vtanh.pop %v555
    %v558 = vtanh.pop %v556
    %v559 = vmul.f32 %v557, 0.5
    %v560 = vmul.f32 %v558, 0.5
    %v561 = vadd.f32 %v559, 0.5
    %v562 = vadd.f32 %v560, 0.5
    %s563 = sld [smem:[#allocation7 + $0xc]]
    %v564 = vstv %s563
    %v565 = vmul.f32 %v179, %v564
    %v566 = vmul.f32 %v180, %v564
    %s567 = sld [smem:[#allocation7 + $0xd]]
    %v568 = vstv %s567
    %v569 = vmul.f32 %v237, %v568
    %v570 = vmul.f32 %v238, %v568
    %v571 = vadd.f32 %v565, %v569
    %v572 = vadd.f32 %v566, %v570
    %s573 = sld [smem:[#allocation7 + $0xe]]
    %v574 = vstv %s573
    %v575 = vmul.f32 %v295, %v574
    %v576 = vmul.f32 %v296, %v574
    %v577 = vadd.f32 %v571, %v575
    %v578 = vadd.f32 %v572, %v576
    %s579 = sld [smem:[#allocation7 + $0xf]]
    %v580 = vstv %s579
    %v581 = vmul.f32 %v353, %v580
    %v582 = vmul.f32 %v354, %v580
    %v583 = vadd.f32 %v577, %v581
    %v584 = vadd.f32 %v578, %v582
    %s585 = sld [smem:[#allocation7 + $0x10]]
    %v586 = vstv %s585
    %v587 = vmul.f32 %v411, %v586
    %v588 = vmul.f32 %v412, %v586
    %v589 = vadd.f32 %v583, %v587
    %v590 = vadd.f32 %v584, %v588
    %s591 = sld [smem:[#allocation7 + $0x11]]
    %v592 = vstv %s591
    %v593 = vmul.f32 %v469, %v592
    %v594 = vmul.f32 %v470, %v592
    %v595 = vadd.f32 %v589, %v593
    %v596 = vadd.f32 %v590, %v594
    %s597 = sld [smem:[#allocation8 + $0x2]]
    %v598 = vstv %s597
    %v599 = vadd.f32 %v595, %v598
    %v600 = vadd.f32 %v596, %v598
    %v601 = vmul.f32 %v599, 0.5
    %v602 = vmul.f32 %v600, 0.5
    %v603 = vtanh.pop %v601
    %v604 = vtanh.pop %v602
    %v605 = vmul.f32 %v603, 0.5
    %v606 = vmul.f32 %v604, 0.5
    %v607 = vadd.f32 %v605, 0.5
    %v608 = vadd.f32 %v606, 0.5
    %s609 = sld [smem:[#allocation7 + $0x12]]
    %v610 = vstv %s609
    %v611 = vmul.f32 %v179, %v610
    %v612 = vmul.f32 %v180, %v610
    %s613 = sld [smem:[#allocation7 + $0x13]]
    %v614 = vstv %s613
    %v615 = vmul.f32 %v237, %v614
    %v616 = vmul.f32 %v238, %v614
    %v617 = vadd.f32 %v611, %v615
    %v618 = vadd.f32 %v612, %v616
    %s619 = sld [smem:[#allocation7 + $0x14]]
    %v620 = vstv %s619
    %v621 = vmul.f32 %v295, %v620
    %v622 = vmul.f32 %v296, %v620
    %v623 = vadd.f32 %v617, %v621
    %v624 = vadd.f32 %v618, %v622
    %s625 = sld [smem:[#allocation7 + $0x15]]
    %v626 = vstv %s625
    %v627 = vmul.f32 %v353, %v626
    %v628 = vmul.f32 %v354, %v626
    %v629 = vadd.f32 %v623, %v627
    %v630 = vadd.f32 %v624, %v628
    %s631 = sld [smem:[#allocation7 + $0x16]]
    %v632 = vstv %s631
    %v633 = vmul.f32 %v411, %v632
    %v634 = vmul.f32 %v412, %v632
    %v635 = vadd.f32 %v629, %v633
    %v636 = vadd.f32 %v630, %v634
    %s637 = sld [smem:[#allocation7 + $0x17]]
    %v638 = vstv %s637
    %v639 = vmul.f32 %v469, %v638
    %v640 = vmul.f32 %v470, %v638
    %v641 = vadd.f32 %v635, %v639
    %v642 = vadd.f32 %v636, %v640
    %s643 = sld [smem:[#allocation8 + $0x3]]
    %v644 = vstv %s643
    %v645 = vadd.f32 %v641, %v644
    %v646 = vadd.f32 %v642, %v644
    %v647 = vmul.f32 %v645, 0.5
    %v648 = vmul.f32 %v646, 0.5
    %v649 = vtanh.pop %v647
    %v650 = vtanh.pop %v648
    %v651 = vmul.f32 %v649, 0.5
    %v652 = vmul.f32 %v650, 0.5
    %v653 = vadd.f32 %v651, 0.5
    %v654 = vadd.f32 %v652, 0.5
    %s655 = sld [smem:[#allocation10]]
    %v656 = vstv %s655
    %v657 = vmul.f32 %v515, %v656
    %v658 = vmul.f32 %v516, %v656
    %s659 = sld [smem:[#allocation10 + $0x1]]
    %v660 = vstv %s659
    %v661 = vmul.f32 %v561, %v660
    %v662 = vmul.f32 %v562, %v660
    %v663 = vadd.f32 %v657, %v661
    %v664 = vadd.f32 %v658, %v662
    %s665 = sld [smem:[#allocation10 + $0x2]]
    %v666 = vstv %s665
    %v667 = vmul.f32 %v607, %v666
    %v668 = vmul.f32 %v608, %v666
    %v669 = vadd.f32 %v663, %v667
    %v670 = vadd.f32 %v664, %v668
    %s671 = sld [smem:[#allocation10 + $0x3]]
    %v672 = vstv %s671
    %v673 = vmul.f32 %v653, %v672
    %v674 = vmul.f32 %v654, %v672
    %v675 = vadd.f32 %v669, %v673
    %v676 = vadd.f32 %v670, %v674
    %s677 = sld [smem:[#allocation2]]
    %v678 = vstv %s677
    %v679 = vadd.f32 %v675, %v678
    %v680 = vadd.f32 %v676, %v678
    %v681 = vmul.f32 %v679, 0.5
    %v682 = vmul.f32 %v680, 0.5
    %v683 = vtanh.pop %v681
    %v684 = vtanh.pop %v682
    %v685 = vmul.f32 %v683, 0.5
    %v686 = vmul.f32 %v684, 0.5
    %v687 = vadd.f32 %v685, 0.5
    %v688 = vadd.f32 %v686, 0.5
    %689 = vst [vmem:[%s7] sm:$0xff] %v687
    %690 = vst [vmem:[%s7 + $0x8] sm:$0xff] %v688
    // Predicated region
    $region50: #{wide_deep_forward.1} parent=1 // pred_check
      _
    $region51: #{wide_deep_forward.1} parent=1 // pred_check_branch
      %692 = sbr.rel (0) target = $region53
    $region52: #{wide_deep_forward.1} parent=1 // pred_region
      _
    $region53: #{wide_deep_forward.1} parent=1 // pred_fallthru
      _
    // Predicated region
    $region54: #{wide_deep_forward.1} parent=1 // pred_check
      _
    $region55: #{wide_deep_forward.1} parent=1 // pred_check_branch
      %694 = sbr.rel (0) target = $region57
    $region56: #{wide_deep_forward.1} parent=1 // pred_region
      _
    $region57: #{wide_deep_forward.1} parent=1 // pred_fallthru
      _
    %695 = vsyncpa [#allocation4], 1
    %696 = vsyncpa [#allocation6], 1
    %697 = vsyncpa [#allocation9], 1

</llo_original>
